<compile_context>
chip_gen: v7x
topology: tpu7x:2x2x1
jax: 0.10.0
libtpu: 0.0.40
codegen_flags: <defaults>
</compile_context>

<pallas_src>
import functools

import jax
import jax.numpy as jnp
from jax.experimental import pallas as pl
from jax.experimental.pallas import tpu as pltpu


# ---------------------------------------------------------------------------
# small helpers
# ---------------------------------------------------------------------------
def _round_up(x: int, m: int) -> int:
    return (x + m - 1) // m * m


def _pad_axis(x: jnp.ndarray, axis: int, target: int) -> jnp.ndarray:
    pad = target - x.shape[axis]
    if pad <= 0:
        return x
    widths = [(0, 0)] * x.ndim
    widths[axis] = (0, pad)
    return jnp.pad(x, widths)


def _sublanes(dtype) -> int:
    return {1: 32, 2: 16}.get(jnp.dtype(dtype).itemsize, 8)


def _tile_bytes(shape, dtype) -> int:
    """Single-buffer VMEM footprint of one (…,) tile, with lane/sublane padding."""
    dt = jnp.dtype(dtype)
    dims = list(shape)
    dims[-1] = _round_up(dims[-1], 128)                 # lanes
    if len(dims) >= 2:
        dims[-2] = _round_up(dims[-2], _sublanes(dt))   # sublane packing
    size = 1
    for d in dims:
        size *= d
    return size * dt.itemsize


def _tpu_generation() -> int:
    try:
        kind = jax.devices()[0].device_kind.lower()
    except Exception:
        return 0
    for g in (7, 6, 5, 4, 3, 2):
        if "v%d" % g in kind:
            return g
    return 0


@functools.lru_cache(maxsize=1)
def _tpu_config():
    """(generation, per-kernel VMEM budget in bytes)."""
    gen = _tpu_generation()
    if gen in (2, 3):
        budget = 24 * 2**20
    elif gen in (4, 5, 6):
        budget = 96 * 2**20          # 128 MiB physical VMEM -> leave headroom
    else:                            # v7x (64 MiB per TC) or unknown -> conservative
        budget = 48 * 2**20
    return gen, budget


def _pick_tn(n, per_item_bytes, budget_bytes, *, frac=0.6, multiple=1, two_steps=False):
    """Largest batch tile tn whose pipelined footprint stays within frac*budget."""
    cap = max(1, int(frac * budget_bytes) // max(int(per_item_bytes), 1))
    tn = min(n, cap)
    if two_steps and n > 1:
        tn = min(tn, max(1, n // 2))     # >=2 grid steps so both v7x cores get work
    if tn < n:
        # 2-D (tn, L) blocks need sublane-aligned tn when not covering the full dim.
        tn = max(multiple, (tn // multiple) * multiple)
    tn = min(tn, _round_up(n, multiple))
    return tn, _round_up(n, tn)


def _detect_buffered() -> bool:
    try:
        pl.BlockSpec((8, 128), lambda i: (i, 0), pipeline_mode=pl.Buffered(3))
        return True
    except Exception:
        return False


_HAS_BUFFERED = _detect_buffered()


def _spec(block_shape, index_map, buffers=2):
    if buffers > 2 and _HAS_BUFFERED:
        return pl.BlockSpec(block_shape, index_map, pipeline_mode=pl.Buffered(buffers))
    return pl.BlockSpec(block_shape, index_map)


# ---------------------------------------------------------------------------
# Kernel 1: batched representation dot product  (torch.bmm(a, b.transpose(-1,-2)))
# ---------------------------------------------------------------------------
def _bmm_nt_kernel(s1_ref, s2_ref, o_ref):
    # s1_ref: (TN, L1p, D), s2_ref: (TN, L2p, D)  ->  o_ref: (TN, L1p, L2p)
    o_ref[...] = jax.lax.dot_general(
        s1_ref[...], s2_ref[...],
        dimension_numbers=(((2,), (2,)), ((0,), (0,))),   # batched a @ b.T over D
        preferred_element_type=jnp.float32,               # f32 accumulation on MXU
    ).astype(o_ref.dtype)


@functools.lru_cache(maxsize=None)
def _build_bmm_call(Np, tn, L1p, L2p, D, in_dtype, out_dtype, buffers, vmem_limit):
    del in_dtype  # part of the cache key only (buffers / tn were chosen with it)
    out_dt = jnp.dtype(out_dtype)
    call = pl.pallas_call(
        _bmm_nt_kernel,
        out_shape=jax.ShapeDtypeStruct((Np, L1p, L2p), out_dt),
        grid=(Np // tn,),
        in_specs=[
            _spec((tn, L1p, D), lambda n: (n, 0, 0), buffers),
            _spec((tn, L2p, D), lambda n: (n, 0, 0), buffers),
        ],
        out_specs=pl.BlockSpec((tn, L1p, L2p), lambda n: (n, 0, 0)),
        compiler_params=pltpu.CompilerParams(
            dimension_semantics=("parallel",),
            vmem_limit_bytes=int(vmem_limit),
        ),
    )
    return jax.jit(call)


def _bmm_nt(sent1_reps, sent2_reps, input_dtype, out_dtype):
    N, L1, D = sent1_reps.shape
    N2, L2, D2 = sent2_reps.shape
    assert N == N2 and D == D2, "batch / feature dims must match"

    in_dt = jnp.dtype(input_dtype) if input_dtype is not None else jnp.dtype(sent1_reps.dtype)
    out_dt = jnp.dtype(out_dtype)
    s1 = sent1_reps.astype(in_dt)
    s2 = sent2_reps.astype(in_dt)

    gen, budget = _tpu_config()

    L1p = _round_up(L1, max(_sublanes(in_dt), _sublanes(out_dt)))
    lane2 = 256 if (gen >= 6 and L2 > 128) else 128   # v6e/v7x MXU is 256 wide on N
    L2p = _round_up(L2, lane2)                        # lane-dense output stores

    # Per-batch-item VMEM footprint with real tile layout, double-buffered.
    t1 = _tile_bytes((L1p, D), in_dt)
    t2 = _tile_bytes((L2p, D), in_dt)
    to = _tile_bytes((L1p, L2p), out_dt)
    per_item = 2 * (t1 + t2 + to)
    # TODO(synk): tile L1/L2 as well when a single batch item exceeds the VMEM budget.
    tn, Np = _pick_tn(N, per_item, budget, two_steps=(gen >= 7 or gen == 0))

    # Triple-buffer the reps inputs when the grid is long enough to benefit and
    # the extra block still fits comfortably (skip near the v7x cap).
    buffers = 3 if (_HAS_BUFFERED and Np // tn >= 4
                    and tn * (3 * (t1 + t2) + 2 * to) <= (3 * budget) // 4) else 2

    s1 = _pad_axis(_pad_axis(s1, 1, L1p), 0, Np)
    s2 = _pad_axis(_pad_axis(s2, 1, L2p), 0, Np)

    call = _build_bmm_call(Np, tn, L1p, L2p, D, in_dt.name, out_dt.name, buffers, budget)
    out = call(s1, s2)
    return out[:N, :L1, :L2]


def reps_dot(sent1_reps, sent2_reps, *, input_dtype=None, out_dtype=jnp.float32):
    """
    (N, L1, D) x (N, L2, D) -> (N, L1, L2).
    input_dtype: optional opt-in cast of the reps (e.g. jnp.bfloat16, or
                 jnp.float8_e4m3fn on v7x); default keeps the input (f32) dtype.
    out_dtype:   similarity dtype (f32 default; bf16 halves the writeback traffic).
    """
    return _bmm_nt(sent1_reps, sent2_reps, input_dtype, out_dtype)


def masked_reps_dot(sent1_reps, sent2_reps, mask1, mask2, *,
                    input_dtype=None, out_dtype=jnp.float32):
    """
    Fused similarity + masking for 0/1 masks: equals mask_sim(reps_dot(s1, s2), m1, m2).
    Masks are applied to the inputs with jnp.where (so Inf/NaN in pad positions are
    truly zeroed), which fuses with the cast/pad in the wrapper under jit.
    """
    zero1 = jnp.zeros((), sent1_reps.dtype)
    zero2 = jnp.zeros((), sent2_reps.dtype)
    s1 = jnp.where((mask1 != 0)[..., None], sent1_reps, zero1)
    s2 = jnp.where((mask2 != 0)[..., None], sent2_reps, zero2)
    return _bmm_nt(s1, s2, input_dtype, out_dtype)


# ---------------------------------------------------------------------------
# Kernel 2: standalone mask_sim (API parity; prefer the fused masked_reps_dot)
# ---------------------------------------------------------------------------
def _mask_sim_kernel(sim_ref, m1_ref, m2_ref, o_ref):
    # sim_ref: (TN, L1p, L2p); m1_ref: (TN, L1p); m2_ref: (TN, L2p)
    o_ref[...] = sim_ref[...] * m1_ref[...][:, :, None] * m2_ref[...][:, None, :]


@functools.lru_cache(maxsize=None)
def _build_mask_sim_call(Np, tn, L1p, L2p, dtype, vmem_limit):
    dt = jnp.dtype(dtype)
    call = pl.pallas_call(
        _mask_sim_kernel,
        out_shape=jax.ShapeDtypeStruct((Np, L1p, L2p), dt),
        grid=(Np // tn,),
        in_specs=[
            pl.BlockSpec((tn, L1p, L2p), lambda n: (n, 0, 0)),
            pl.BlockSpec((tn, L1p), lambda n: (n, 0)),
            pl.BlockSpec((tn, L2p), lambda n: (n, 0)),
        ],
        out_specs=pl.BlockSpec((tn, L1p, L2p), lambda n: (n, 0, 0)),
        input_output_aliases={0: 0},   # sim buffer reused for the output
        compiler_params=pltpu.CompilerParams(
            dimension_semantics=("parallel",),
            vmem_limit_bytes=int(vmem_limit),
        ),
    )
    # jit object is cached per shape signature (no per-call retrace/recompile);
    # the (padded) sim operand is donated so the alias is actually used.
    return jax.jit(call, donate_argnums=(0,))


def mask_sim(sim, mask1, mask2):
    """
    sim: (N, L1, L2);  mask1: (N, L1);  mask2: (N, L2)
    Returns sim with pad-token similarities zeroed.  Note: the (padded) sim buffer
    is donated / updated in place; when padding is needed, the donated buffer is a
    fresh padded copy and the caller's array is untouched.
    """
    N, L1, L2 = sim.shape
    dt = jnp.dtype(sim.dtype)
    m1 = mask1.astype(dt)
    m2 = mask2.astype(dt)

    gen, budget = _tpu_config()
    L1p = _round_up(L1, _sublanes(dt))
    L2p = _round_up(L2, 128)            # lane-dense loads/stores (unmasked vst)

    t_sim = _tile_bytes((L1p, L2p), dt)
    per_item = 2 * (2 * t_sim + (_round_up(L1p, 128) + _round_up(L2p, 128)) * dt.itemsize)
    tn, Np = _pick_tn(N, per_item, budget, multiple=8,
                      two_steps=(gen >= 7 or gen == 0))

    simp = _pad_axis(_pad_axis(_pad_axis(sim, 2, L2p), 1, L1p), 0, Np)
    m1 = _pad_axis(_pad_axis(m1, 1, L1p), 0, Np)
    m2 = _pad_axis(_pad_axis(m2, 1, L2p), 0, Np)

    call = _build_mask_sim_call(Np, tn, L1p, L2p, dt.name, budget)
    out = call(simp, m1, m2)
    return out[:N, :L1, :L2]


# ---------------------------------------------------------------------------
# Base-module "class" equivalent (glue; forward itself is abstract in PyTorch)
# ---------------------------------------------------------------------------
class SimilarityScorerBase:
    def __init__(self, sim_func, emb_log=None):
        self.sim_func = sim_func
        self.emb_log = emb_log
        self.log_content = ""
        self.mlc_support_tags_mask = None

    def update_mlc_support_tags_mask(self, support_targets, support_output_mask):
        # glue: tiny int/bool reshapes + reductions; plain JAX.
        batch_size = support_targets.shape[0]
        num_tags = support_targets.shape[-1]
        mask = jnp.broadcast_to(support_output_mask[..., None], support_targets.shape)
        tags_mask = mask * support_targets
        tags_mask = jnp.sum(tags_mask.reshape(batch_size, -1, num_tags), axis=1)
        self.mlc_support_tags_mask = (tags_mask >= 1).astype(jnp.float32)

    def forward(self, *args, **kwargs):
        # TODO(synk): abstract in the PyTorch source (raises NotImplementedError);
        # concrete scorers compose masked_reps_dot / reps_dot + mask_sim (demo below).
        raise NotImplementedError()

    @staticmethod
    def mask_sim(sim, mask1, mask2):
        return mask_sim(sim, mask1, mask2)

    @staticmethod
    def masked_sim(sent1_reps, sent2_reps, mask1, mask2, **kw):
        return masked_reps_dot(sent1_reps, sent2_reps, mask1, mask2, **kw)

    @staticmethod
    def expand_it(item: jnp.ndarray, support_size: int) -> jnp.ndarray:
        item = item[:, None]
        expand_shape = list(item.shape)
        expand_shape[1] = support_size
        return jnp.broadcast_to(item, tuple(expand_shape))


if __name__ == "__main__":
    key = jax.random.PRNGKey(0)
    k1, k2, k3, k4, k5 = jax.random.split(key, 5)

    batch, support, test_len, support_len, dim, num_tags = 2, 4, 8, 8, 32, 5

    test_reps = jax.random.normal(k1, (batch, support, test_len, dim), dtype=jnp.float32)
    support_reps = jax.random.normal(k2, (batch, support, support_len, dim), dtype=jnp.float32)
    test_output_mask = (jax.random.uniform(k3, (batch, test_len)) > 0.3).astype(jnp.float32)
    support_output_mask = (jax.random.uniform(k4, (batch, support, support_len)) > 0.3).astype(jnp.float32)
    support_targets = (jax.random.uniform(k5, (batch, support, support_len, num_tags)) > 0.7).astype(jnp.float32)

    scorer = SimilarityScorerBase(sim_func=reps_dot)
    scorer.update_mlc_support_tags_mask(support_targets, support_output_mask)

    # "Subclass-style" pipeline: expand test mask over support dim, flatten
    # (batch*support), then similarity + masking.
    num_sim = batch * support
    test_mask_flat = scorer.expand_it(test_output_mask, support).reshape(num_sim, test_len)
    support_mask_flat = support_output_mask.reshape(num_sim, support_len)
    test_flat = test_reps.reshape(num_sim, test_len, dim)
    support_flat = support_reps.reshape(num_sim, support_len, dim)

    # Hot path: fused masked similarity (default f32 in / f32 out).
    sim_fused = masked_reps_dot(test_flat, support_flat, test_mask_flat, support_mask_flat)
    sim_fused = jax.block_until_ready(sim_fused)

    # API-parity path: reps_dot then the standalone mask_sim Pallas kernel.
    sim = scorer.sim_func(test_flat, support_flat)
    sim_masked = scorer.mask_sim(sim, test_mask_flat, support_mask_flat)
    sim_masked = jax.block_until_ready(sim_masked)

    # Reference (plain JAX f32).  Tolerance is loose enough to absorb the MXU's
    # default-precision f32 matmul path; structural errors would be O(1)+.
    ref_sim = jnp.einsum("nld,nkd->nlk", test_flat, support_flat,
                         precision=jax.lax.Precision.HIGHEST)
    ref_masked = ref_sim * (test_mask_flat[:, :, None] * support_mask_flat[:, None, :])

    assert sim_fused.shape == (num_sim, test_len, support_len)
    assert sim_masked.shape == (num_sim, test_len, support_len)
    assert sim_fused.dtype == jnp.float32 and sim_masked.dtype == jnp.float32
    assert jnp.allclose(sim_fused, ref_masked, atol=0.15, rtol=0.02)
    assert jnp.allclose(sim_masked, ref_masked, atol=0.15, rtol=0.02)
    assert jnp.allclose(sim_fused, sim_masked, atol=1e-5, rtol=1e-5)

    # Opt-in low-precision path: bf16 inputs + bf16 output, f32 MXU accumulation.
    sim_bf16 = masked_reps_dot(test_flat, support_flat, test_mask_flat, support_mask_flat,
                               input_dtype=jnp.bfloat16, out_dtype=jnp.bfloat16)
    sim_bf16 = jax.block_until_ready(sim_bf16)
    q = lambda x: x.astype(jnp.bfloat16).astype(jnp.float32)
    ref_bf16 = (jnp.einsum("nld,nkd->nlk", q(test_flat), q(support_flat),
                           precision=jax.lax.Precision.HIGHEST)
                * (test_mask_flat[:, :, None] * support_mask_flat[:, None, :]))
    assert sim_bf16.dtype == jnp.bfloat16
    assert jnp.allclose(sim_bf16.astype(jnp.float32), ref_bf16, atol=2e-2, rtol=2e-2)

    assert scorer.mlc_support_tags_mask.shape == (batch, num_tags)

    print("KERNEL_OK")
</pallas_src>

<mosaic_0001>
module attributes {stable_mosaic.version = 11 : i64} {
  func.func @_bmm_nt_kernel(%arg0: i32, %arg1: memref<4x8x32xf32, #tpu.memory_space<vmem>>, %arg2: memref<4x128x32xf32, #tpu.memory_space<vmem>>, %arg3: memref<4x8x128xf32, #tpu.memory_space<vmem>>) attributes {dimension_semantics = [#tpu.dimension_semantics<parallel>], iteration_bounds = array<i64: 2>, scalar_prefetch = 0 : i64, scratch_operands = 0 : i64, tpu.core_type = #tpu.core_type<tc>, window_params = [{transform_indices = @transform_0, window_bounds = array<i64: 4, 8, 32>}, {transform_indices = @transform_1, window_bounds = array<i64: 4, 128, 32>}, {transform_indices = @transform_2, window_bounds = array<i64: 4, 8, 128>}]} {
    %c0 = arith.constant 0 : index
    %c0_0 = arith.constant 0 : index
    %c0_1 = arith.constant 0 : index
    %0 = vector.load %arg1[%c0, %c0_0, %c0_1] : memref<4x8x32xf32, #tpu.memory_space<vmem>>, vector<4x8x32xf32>
    %c0_2 = arith.constant 0 : index
    %c0_3 = arith.constant 0 : index
    %c0_4 = arith.constant 0 : index
    %1 = vector.load %arg2[%c0_2, %c0_3, %c0_4] : memref<4x128x32xf32, #tpu.memory_space<vmem>>, vector<4x128x32xf32>
    %cst = arith.constant dense<0.000000e+00> : vector<4x8x128xf32>
    %2 = tpu.matmul %0, %1, %cst {dimension_numbers = #tpu.dot_dimension_numbers<[2], [2], [1], [1], [0, 0, 0, 1, 1, 1], [0], [0]>} : vector<4x8x32xf32>, vector<4x128x32xf32>, vector<4x8x128xf32> -> vector<4x8x128xf32>
    %c0_5 = arith.constant 0 : index
    %c0_6 = arith.constant 0 : index
    %c0_7 = arith.constant 0 : index
    %3 = vector.load %arg3[%c0_5, %c0_6, %c0_7] : memref<4x8x128xf32, #tpu.memory_space<vmem>>, vector<4x8x128xf32>
    tpu.vector_store %arg3[%c0_5, %c0_6, %c0_7], %2 {strides = array<i32>} : memref<4x8x128xf32, #tpu.memory_space<vmem>>, vector<4x8x128xf32>,
    return
  }
  func.func @transform_0(%arg0: i32) -> (i32, i32, i32) {
    %c0_i32 = arith.constant 0 : i32
    %c0_i32_0 = arith.constant 0 : i32
    %c0_i32_1 = arith.constant 0 : i32
    return %arg0, %c0_i32, %c0_i32_0 : i32, i32, i32
  }
  func.func @transform_1(%arg0: i32) -> (i32, i32, i32) {
    %c0_i32 = arith.constant 0 : i32
    %c0_i32_0 = arith.constant 0 : i32
    %c0_i32_1 = arith.constant 0 : i32
    return %arg0, %c0_i32, %c0_i32_0 : i32, i32, i32
  }
  func.func @transform_2(%arg0: i32) -> (i32, i32, i32) {
    %c0_i32 = arith.constant 0 : i32
    %c0_i32_0 = arith.constant 0 : i32
    %c0_i32_1 = arith.constant 0 : i32
    return %arg0, %c0_i32, %c0_i32_0 : i32, i32, i32
  }
}

</mosaic_0001>

<llo_original>
// kernel: tpu_custom_call.1
$region0: #{tpu_custom_call.1}
  #allocation0 [shape = 'u32[]', space=smem, size = 0x4, offset = 0x4, fixed_abs, tag = 'smem constant byte address 0x4 - core index']
  #allocation1 [shape = 'u32[144,128]{1,0:T(1,128)}', space=vmem, size = 0x12000, scoped, tag = 'internal scratch']
  %s0 = inlined_call_operand.vmem [shape: f32[8,8,32], index: 0, kind: input, shape index: {}]
  %s1 = inlined_call_operand.vmem [shape: f32[8,128,32], index: 1, kind: input, shape index: {}]
  %s2 = inlined_call_operand.hbm [shape: f32[8,8,128], index: 2, kind: output, shape index: {}]
  %s3 = sld [smem:[#allocation0]]
  $region41: #{tpu_custom_call.1} parent=0
    _
  %s5 = ssub.s32 1, %s3
  %s6 = scalar_select 0, %s5, %s3
  $region1: #{tpu_custom_call.1} parent=0
    #allocation2 [shape = 'u8[32768]{0}', space=vmem, size = 0x8000, scoped, tag = 'output window, operand 0']
    #allocation3 [shape = 's32[2]{0}', space=sflag, size = 0x8, scoped, tag = 'scoped memory for tpu_custom_call.1']
    %7 = vsyncpa [#allocation3], 0
    %s8 = scalar_lea.sflag [#allocation3], 1
    %9 = vsyncpa %s8, 0
    loop: start=0, step=1, limit=4
    $region2: #{tpu_custom_call.1} parent=1 // loop_pre_header
      _
    $region3: #{tpu_custom_call.1} parent=1 // loop_header
      %s11 = sphi 0, %s15
      %p12 = scmp.ge.s32.totalorder %s11, 4
      %s21 = sphi 0, %s23
      %s24 = sphi 0, %s21
      %s25 = sphi 0, %s24
      %s41 = sphi 0, %s25
      %s47 = sphi 0, %s49
      %s50 = sphi 0, %s47
      %s51 = sphi 0, %s50
      %s67 = sphi 0, %s51
      %s73 = sphi 0, %s75
      %s76 = sphi 0, %s73
      %s77 = sphi 0, %s76
      %s93 = sphi 0, %s77
    $region4: #{tpu_custom_call.1} parent=1 // loop_header_branch
      %14 = sbr.rel (%p12) target = $region8
    $region5: #{tpu_custom_call.1} parent=1 // loop_body
      %s16 = ssub.s32 %s11, 1
      %s17 = ssub.s32 %s11, 2
      %s18 = sadd.s32 %s11, 1
      %s19 = ssub.s32 %s11, %s18
      %p20 = scmp.eq.s32.totalorder %s19, 0
      %s22 = sadd.s32 %s21, 1
      %s23 = scalar_select %p20, %s21, %s22
      %p26 = pneg %p20
      %p27 = scmp.eq.s32.totalorder %s11, 1
      %p28 = por %p26, %p27
      %p29 = scmp.ne.s32.totalorder %s21, %s24
      %p30 = scmp.eq.s32.totalorder %s11, 0
      %p31 = por %p29, %p30
      %p32 = scmp.ne.s32.totalorder %s21, %s24
      %p33 = scmp.eq.s32.totalorder %s16, 1
      %p34 = por %p32, %p33
      %p35 = scmp.ne.s32.totalorder %s24, %s25
      %p36 = scmp.eq.s32.totalorder %s16, 0
      %p37 = por %p35, %p36
      %p38 = scmp.ne.s32.totalorder %s24, %s25
      %p39 = scmp.eq.s32.totalorder %s17, 1
      %p40 = por %p38, %p39
      %p42 = scmp.ne.s32.totalorder %s25, %s41
      %p43 = scmp.eq.s32.totalorder %s17, 0
      %p44 = por %p42, %p43
      %s45 = ssub.s32 %s11, %s18
      %p46 = scmp.eq.s32.totalorder %s45, 0
      %s48 = sadd.s32 %s47, 1
      %s49 = scalar_select %p46, %s47, %s48
      %p52 = pneg %p46
      %p53 = scmp.eq.s32.totalorder %s11, 1
      %p54 = por %p52, %p53
      %p55 = scmp.ne.s32.totalorder %s47, %s50
      %p56 = scmp.eq.s32.totalorder %s11, 0
      %p57 = por %p55, %p56
      %p58 = scmp.ne.s32.totalorder %s47, %s50
      %p59 = scmp.eq.s32.totalorder %s16, 1
      %p60 = por %p58, %p59
      %p61 = scmp.ne.s32.totalorder %s50, %s51
      %p62 = scmp.eq.s32.totalorder %s16, 0
      %p63 = por %p61, %p62
      %p64 = scmp.ne.s32.totalorder %s50, %s51
      %p65 = scmp.eq.s32.totalorder %s17, 1
      %p66 = por %p64, %p65
      %p68 = scmp.ne.s32.totalorder %s51, %s67
      %p69 = scmp.eq.s32.totalorder %s17, 0
      %p70 = por %p68, %p69
      %s71 = ssub.s32 %s11, %s18
      %p72 = scmp.eq.s32.totalorder %s71, 0
      %s74 = sadd.s32 %s73, 1
      %s75 = scalar_select %p72, %s73, %s74
      %p78 = pneg %p72
      %p79 = scmp.eq.s32.totalorder %s11, 1
      %p80 = por %p78, %p79
      %p81 = scmp.ne.s32.totalorder %s73, %s76
      %p82 = scmp.eq.s32.totalorder %s11, 0
      %p83 = por %p81, %p82
      %p84 = scmp.ne.s32.totalorder %s73, %s76
      %p85 = scmp.eq.s32.totalorder %s16, 1
      %p86 = por %p84, %p85
      %p87 = scmp.ne.s32.totalorder %s76, %s77
      %p88 = scmp.eq.s32.totalorder %s16, 0
      %p89 = por %p87, %p88
      %p90 = scmp.ne.s32.totalorder %s76, %s77
      %p91 = scmp.eq.s32.totalorder %s17, 1
      %p92 = por %p90, %p91
      %p94 = scmp.ne.s32.totalorder %s77, %s93
      %p95 = scmp.eq.s32.totalorder %s17, 0
      %p96 = por %p94, %p95
      %p97 = scmp.le.s32.totalorder 1, %s11
      %p98 = scmp.lt.s32.totalorder %s11, 3
      %p99 = pnand %p97, %p98
      %p100 = pneg %p99
      // Predicated region
      $region9: #{tpu_custom_call.1} parent=5 // pred_check
        _
      $region10: #{tpu_custom_call.1} parent=5 // pred_check_branch
        %102 = sbr.rel (%p99) target = $region12
      $region11: #{tpu_custom_call.1} parent=5 // pred_region
        %s103 = ssub.s32 %s11, 1
      $region12: #{tpu_custom_call.1} parent=5 // pred_fallthru
        _
      %p104 = scmp.lt.s32.totalorder %s11, 2
      // Predicated region
      $region13: #{tpu_custom_call.1} parent=5 // pred_check
        %p105 = pneg %p104
      $region14: #{tpu_custom_call.1} parent=5 // pred_check_branch
        %107 = sbr.rel (%p105) target = $region16
      $region15: #{tpu_custom_call.1} parent=5 // pred_region
        // Predicated region
        $region17: #{tpu_custom_call.1} parent=15 // pred_check
          %p108 = pneg %p31
        $region18: #{tpu_custom_call.1} parent=15 // pred_check_branch
          %110 = sbr.rel (%p108) target = $region20
        $region19: #{tpu_custom_call.1} parent=15 // pred_region
          %s111 = smul.u32 4, %s11
          %p112 = scmp.lt.s32.totalorder %s111, 7
          %s113 = scalar_select %p112, %s111, 7
          %s114 = smul.addr %s113, 8
          %s115 = scalar_lea.vmem %s0, %s114
          %s116 = smul.u32 4, %s11
        $region20: #{tpu_custom_call.1} parent=15 // pred_fallthru
          _
        // Predicated region
        $region21: #{tpu_custom_call.1} parent=15 // pred_check
          %p117 = pneg %p57
        $region22: #{tpu_custom_call.1} parent=15 // pred_check_branch
          %119 = sbr.rel (%p117) target = $region24
        $region23: #{tpu_custom_call.1} parent=15 // pred_region
          %s120 = smul.u32 4, %s11
          %p121 = scmp.lt.s32.totalorder %s120, 7
          %s122 = scalar_select %p121, %s120, 7
          %s123 = smul.addr %s122, 16
          %s124 = smul.addr %s123, 8
          %s125 = scalar_lea.vmem %s1, %s124
          %s126 = smul.u32 4, %s11
        $region24: #{tpu_custom_call.1} parent=15 // pred_fallthru
          _
      $region16: #{tpu_custom_call.1} parent=5 // pred_fallthru
        _
      %p127 = scmp.le.s32.totalorder 1, %s11
      %p128 = scmp.lt.s32.totalorder %s11, 3
      %p129 = pnand %p127, %p128
      %p130 = pneg %p129
      // Predicated region
      $region25: #{tpu_custom_call.1} parent=5 // pred_check
        _
      $region26: #{tpu_custom_call.1} parent=5 // pred_check_branch
        %132 = sbr.rel (%p129) target = $region28
      $region27: #{tpu_custom_call.1} parent=5 // pred_region
        %s133 = ssub.s32 %s11, 1
        %s134 = smul.u32 4, %s16
        %p135 = scmp.lt.s32.totalorder %s134, 7
        %s136 = scalar_select %p135, %s134, 7
        %s137 = smul.addr %s136, 8
        %s138 = scalar_lea.vmem %s0, %s137
        %p139 = pneg %p37
        %p140 = pneg %p34
        %s141 = smul.u32 4, %s16
        %p142 = scmp.lt.s32.totalorder %s141, 7
        %s143 = scalar_select %p142, %s141, 7
        %s144 = smul.addr %s143, 16
        %s145 = smul.addr %s144, 8
        %s146 = scalar_lea.vmem %s1, %s145
        %p147 = pneg %p63
        %p148 = pneg %p60
        %p149 = pneg %p89
        %p150 = pneg %p86
        %s151 = sand.u32 %s76, 1
        %s152 = scalar_lea.sflag [#allocation3], %s151
        %s153 = sand.u32 %s76, 1
        %s154 = smul.addr %s153, 32
        %s155 = scalar_lea.vmem [#allocation2], %s154
        %s156 = smul.u32 4, %s16
        %p157 = scmp.lt.s32.totalorder %s156, 7
        %s158 = scalar_select %p157, %s156, 7
        %s159 = smul.addr %s158, 8
        %s160 = scalar_lea.vmem %s0, %s159
        %s161 = smul.u32 4, %s16
        %s162 = smul.u32 4, %s16
        %p163 = scmp.lt.s32.totalorder %s162, 7
        %s164 = scalar_select %p163, %s162, 7
        %s165 = smul.addr %s164, 16
        %s166 = smul.addr %s165, 8
        %s167 = scalar_lea.vmem %s1, %s166
        %s168 = smul.u32 4, %s16
        %s169 = smul.u32 4, %s16
        %v170 = vld [vmem:[%s160] sm:$0xff]
        %v171 = vld [vmem:[%s160 + $0x8] sm:$0xff]
        %v172 = vld [vmem:[%s160 + $0x10] sm:$0xff]
        %v173 = vld [vmem:[%s160 + $0x18] sm:$0xff]
        %v174 = vld [vmem:[%s167] sm:$0xff]
        %v175 = vld [vmem:[%s167 + $0x8] sm:$0xff]
        %v176 = vld [vmem:[%s167 + $0x10] sm:$0xff]
        %v177 = vld [vmem:[%s167 + $0x18] sm:$0xff]
        %v178 = vld [vmem:[%s167 + $0x20] sm:$0xff]
        %v179 = vld [vmem:[%s167 + $0x28] sm:$0xff]
        %v180 = vld [vmem:[%s167 + $0x30] sm:$0xff]
        %v181 = vld [vmem:[%s167 + $0x38] sm:$0xff]
        %v182 = vld [vmem:[%s167 + $0x40] sm:$0xff]
        %v183 = vld [vmem:[%s167 + $0x48] sm:$0xff]
        %v184 = vld [vmem:[%s167 + $0x50] sm:$0xff]
        %v185 = vld [vmem:[%s167 + $0x58] sm:$0xff]
        %v186 = vld [vmem:[%s167 + $0x60] sm:$0xff]
        %v187 = vld [vmem:[%s167 + $0x68] sm:$0xff]
        %v188 = vld [vmem:[%s167 + $0x70] sm:$0xff]
        %v189 = vld [vmem:[%s167 + $0x78] sm:$0xff]
        %v190 = vld [vmem:[%s167 + $0x80] sm:$0xff]
        %v191 = vld [vmem:[%s167 + $0x88] sm:$0xff]
        %v192 = vld [vmem:[%s167 + $0x90] sm:$0xff]
        %v193 = vld [vmem:[%s167 + $0x98] sm:$0xff]
        %v194 = vld [vmem:[%s167 + $0xa0] sm:$0xff]
        %v195 = vld [vmem:[%s167 + $0xa8] sm:$0xff]
        %v196 = vld [vmem:[%s167 + $0xb0] sm:$0xff]
        %v197 = vld [vmem:[%s167 + $0xb8] sm:$0xff]
        %v198 = vld [vmem:[%s167 + $0xc0] sm:$0xff]
        %v199 = vld [vmem:[%s167 + $0xc8] sm:$0xff]
        %v200 = vld [vmem:[%s167 + $0xd0] sm:$0xff]
        %v201 = vld [vmem:[%s167 + $0xd8] sm:$0xff]
        %v202 = vld [vmem:[%s167 + $0xe0] sm:$0xff]
        %v203 = vld [vmem:[%s167 + $0xe8] sm:$0xff]
        %v204 = vld [vmem:[%s167 + $0xf0] sm:$0xff]
        %v205 = vld [vmem:[%s167 + $0xf8] sm:$0xff]
        %v206 = vld [vmem:[%s167 + $0x100] sm:$0xff]
        %v207 = vld [vmem:[%s167 + $0x108] sm:$0xff]
        %v208 = vld [vmem:[%s167 + $0x110] sm:$0xff]
        %v209 = vld [vmem:[%s167 + $0x118] sm:$0xff]
        %v210 = vld [vmem:[%s167 + $0x120] sm:$0xff]
        %v211 = vld [vmem:[%s167 + $0x128] sm:$0xff]
        %v212 = vld [vmem:[%s167 + $0x130] sm:$0xff]
        %v213 = vld [vmem:[%s167 + $0x138] sm:$0xff]
        %v214 = vld [vmem:[%s167 + $0x140] sm:$0xff]
        %v215 = vld [vmem:[%s167 + $0x148] sm:$0xff]
        %v216 = vld [vmem:[%s167 + $0x150] sm:$0xff]
        %v217 = vld [vmem:[%s167 + $0x158] sm:$0xff]
        %v218 = vld [vmem:[%s167 + $0x160] sm:$0xff]
        %v219 = vld [vmem:[%s167 + $0x168] sm:$0xff]
        %v220 = vld [vmem:[%s167 + $0x170] sm:$0xff]
        %v221 = vld [vmem:[%s167 + $0x178] sm:$0xff]
        %v222 = vld [vmem:[%s167 + $0x180] sm:$0xff]
        %v223 = vld [vmem:[%s167 + $0x188] sm:$0xff]
        %v224 = vld [vmem:[%s167 + $0x190] sm:$0xff]
        %v225 = vld [vmem:[%s167 + $0x198] sm:$0xff]
        %v226 = vld [vmem:[%s167 + $0x1a0] sm:$0xff]
        %v227 = vld [vmem:[%s167 + $0x1a8] sm:$0xff]
        %v228 = vld [vmem:[%s167 + $0x1b0] sm:$0xff]
        %v229 = vld [vmem:[%s167 + $0x1b8] sm:$0xff]
        %v230 = vld [vmem:[%s167 + $0x1c0] sm:$0xff]
        %v231 = vld [vmem:[%s167 + $0x1c8] sm:$0xff]
        %v232 = vld [vmem:[%s167 + $0x1d0] sm:$0xff]
        %v233 = vld [vmem:[%s167 + $0x1d8] sm:$0xff]
        %v234 = vld [vmem:[%s167 + $0x1e0] sm:$0xff]
        %v235 = vld [vmem:[%s167 + $0x1e8] sm:$0xff]
        %v236 = vld [vmem:[%s167 + $0x1f0] sm:$0xff]
        %v237 = vld [vmem:[%s167 + $0x1f8] sm:$0xff]
        %vm238 = vcmask 261120
        %v240 = vsel %vm238, %v170, 0
        %v243 = vsel %vm238, %v174, 0
        %v246 = vsel %vm238, %v175, 0
        %v249 = vsel %vm238, %v176, 0
        %v252 = vsel %vm238, %v177, 0
        %v255 = vsel %vm238, %v178, 0
        %v258 = vsel %vm238, %v179, 0
        %v261 = vsel %vm238, %v180, 0
        %v264 = vsel %vm238, %v181, 0
        %v267 = vsel %vm238, %v182, 0
        %v270 = vsel %vm238, %v183, 0
        %v273 = vsel %vm238, %v184, 0
        %v276 = vsel %vm238, %v185, 0
        %v279 = vsel %vm238, %v186, 0
        %v282 = vsel %vm238, %v187, 0
        %v285 = vsel %vm238, %v188, 0
        %v288 = vsel %vm238, %v189, 0
        %290 = vmatprep.subr.mxu0 0.0
        %291 = vmatpush1.xpose.msra.mxu0 %v243
        %292 = vmatprep.subr.mxu0 0.0
        %293 = vmatpush1.xpose.msra.mxu0 %v246
        %294 = vmatprep.subr.mxu0 0.0
        %295 = vmatpush1.xpose.msra.mxu0 %v249
        %296 = vmatprep.subr.mxu0 0.0
        %297 = vmatpush1.xpose.msra.mxu0 %v252
        %298 = vmatprep.subr.mxu0 0.0
        %299 = vmatpush1.xpose.msra.mxu0 %v255
        %300 = vmatprep.subr.mxu0 0.0
        %301 = vmatpush1.xpose.msra.mxu0 %v258
        %302 = vmatprep.subr.mxu0 0.0
        %303 = vmatpush1.xpose.msra.mxu0 %v261
        %304 = vmatprep.subr.mxu0 0.0
        %305 = vmatpush1.xpose.msra.mxu0 %v264
        %306 = vmatprep.subr.mxu0 0.0
        %307 = vmatpush1.xpose.msra.mxu0 %v267
        %308 = vmatprep.subr.mxu0 0.0
        %309 = vmatpush1.xpose.msra.mxu0 %v270
        %310 = vmatprep.subr.mxu0 0.0
        %311 = vmatpush1.xpose.msra.mxu0 %v273
        %312 = vmatprep.subr.mxu0 0.0
        %313 = vmatpush1.xpose.msra.mxu0 %v276
        %314 = vmatprep.subr.mxu0 0.0
        %315 = vmatpush1.xpose.msra.mxu0 %v279
        %316 = vmatprep.subr.mxu0 0.0
        %317 = vmatpush1.xpose.msra.mxu0 %v282
        %318 = vmatprep.subr.mxu0 0.0
        %319 = vmatpush1.xpose.msra.mxu0 %v285
        %320 = vmatprep.subr.mxu0 0.0
        %321 = vmatpush1.xpose.msra.mxu0 %v288
        %322 = vmatprep.subr.mxu0 0.0
        %323 = vmatpush1.xpose.msra.mxu0 0.0
        %324 = vmatprep.subr.mxu0 0.0
        %325 = vmatpush1.xpose.msra.mxu0 0.0
        %326 = vmatprep.subr.mxu0 0.0
        %327 = vmatpush1.xpose.msra.mxu0 0.0
        %328 = vmatprep.subr.mxu0 0.0
        %329 = vmatpush1.xpose.msra.mxu0 0.0
        %330 = vmatprep.subr.mxu0 0.0
        %331 = vmatpush1.xpose.msra.mxu0 0.0
        %332 = vmatprep.subr.mxu0 0.0
        %333 = vmatpush1.xpose.msra.mxu0 0.0
        %334 = vmatprep.subr.mxu0 0.0
        %335 = vmatpush1.xpose.msra.mxu0 0.0
        %336 = vmatprep.subr.mxu0 0.0
        %337 = vmatpush1.xpose.msra.mxu0 0.0
        %338 = vmatprep.subr.mxu0 0.0
        %339 = vmatpush1.xpose.msra.mxu0 0.0
        %340 = vmatprep.subr.mxu0 0.0
        %341 = vmatpush1.xpose.msra.mxu0 0.0
        %342 = vmatprep.subr.mxu0 0.0
        %343 = vmatpush1.xpose.msra.mxu0 0.0
        %344 = vmatprep.subr.mxu0 0.0
        %345 = vmatpush1.xpose.msra.mxu0 0.0
        %346 = vmatprep.subr.mxu0 0.0
        %347 = vmatpush1.xpose.msra.mxu0 0.0
        %348 = vmatprep.subr.mxu0 0.0
        %349 = vmatpush1.xpose.msra.mxu0 0.0
        %350 = vmatprep.subr.mxu0 0.0
        %351 = vmatpush1.xpose.msra.mxu0 0.0
        %352 = vmatprep.subr.mxu0 0.0
        %353 = vmatpush1.xpose.msra.mxu0 0.0
        %354 = vmatprep.mubr.f32.mxu0 0.0
        %355 = vmatmul.mubr.f32.gmra.mrb[0].mxu0 %v240
        %v356 = vpop.f32.mrb[0].mxu0
        %v357 = vadd.f32 0.0, %v356
        %v358 = vpop.f32.mrb[0].mxu0
        %359 = vdwg.mxu0
        %v361 = vsel %vm238, %v171, 0
        %v364 = vsel %vm238, %v190, 0
        %v367 = vsel %vm238, %v191, 0
        %v370 = vsel %vm238, %v192, 0
        %v373 = vsel %vm238, %v193, 0
        %v376 = vsel %vm238, %v194, 0
        %v379 = vsel %vm238, %v195, 0
        %v382 = vsel %vm238, %v196, 0
        %v385 = vsel %vm238, %v197, 0
        %v388 = vsel %vm238, %v198, 0
        %v391 = vsel %vm238, %v199, 0
        %v394 = vsel %vm238, %v200, 0
        %v397 = vsel %vm238, %v201, 0
        %v400 = vsel %vm238, %v202, 0
        %v403 = vsel %vm238, %v203, 0
        %v406 = vsel %vm238, %v204, 0
        %v409 = vsel %vm238, %v205, 0
        %411 = vmatprep.subr.mxu0 0.0
        %412 = vmatpush1.xpose.msra.mxu0 %v364
        %413 = vmatprep.subr.mxu0 0.0
        %414 = vmatpush1.xpose.msra.mxu0 %v367
        %415 = vmatprep.subr.mxu0 0.0
        %416 = vmatpush1.xpose.msra.mxu0 %v370
        %417 = vmatprep.subr.mxu0 0.0
        %418 = vmatpush1.xpose.msra.mxu0 %v373
        %419 = vmatprep.subr.mxu0 0.0
        %420 = vmatpush1.xpose.msra.mxu0 %v376
        %421 = vmatprep.subr.mxu0 0.0
        %422 = vmatpush1.xpose.msra.mxu0 %v379
        %423 = vmatprep.subr.mxu0 0.0
        %424 = vmatpush1.xpose.msra.mxu0 %v382
        %425 = vmatprep.subr.mxu0 0.0
        %426 = vmatpush1.xpose.msra.mxu0 %v385
        %427 = vmatprep.subr.mxu0 0.0
        %428 = vmatpush1.xpose.msra.mxu0 %v388
        %429 = vmatprep.subr.mxu0 0.0
        %430 = vmatpush1.xpose.msra.mxu0 %v391
        %431 = vmatprep.subr.mxu0 0.0
        %432 = vmatpush1.xpose.msra.mxu0 %v394
        %433 = vmatprep.subr.mxu0 0.0
        %434 = vmatpush1.xpose.msra.mxu0 %v397
        %435 = vmatprep.subr.mxu0 0.0
        %436 = vmatpush1.xpose.msra.mxu0 %v400
        %437 = vmatprep.subr.mxu0 0.0
        %438 = vmatpush1.xpose.msra.mxu0 %v403
        %439 = vmatprep.subr.mxu0 0.0
        %440 = vmatpush1.xpose.msra.mxu0 %v406
        %441 = vmatprep.subr.mxu0 0.0
        %442 = vmatpush1.xpose.msra.mxu0 %v409
        %443 = vmatprep.subr.mxu0 0.0
        %444 = vmatpush1.xpose.msra.mxu0 0.0
        %445 = vmatprep.subr.mxu0 0.0
        %446 = vmatpush1.xpose.msra.mxu0 0.0
        %447 = vmatprep.subr.mxu0 0.0
        %448 = vmatpush1.xpose.msra.mxu0 0.0
        %449 = vmatprep.subr.mxu0 0.0
        %450 = vmatpush1.xpose.msra.mxu0 0.0
        %451 = vmatprep.subr.mxu0 0.0
        %452 = vmatpush1.xpose.msra.mxu0 0.0
        %453 = vmatprep.subr.mxu0 0.0
        %454 = vmatpush1.xpose.msra.mxu0 0.0
        %455 = vmatprep.subr.mxu0 0.0
        %456 = vmatpush1.xpose.msra.mxu0 0.0
        %457 = vmatprep.subr.mxu0 0.0
        %458 = vmatpush1.xpose.msra.mxu0 0.0
        %459 = vmatprep.subr.mxu0 0.0
        %460 = vmatpush1.xpose.msra.mxu0 0.0
        %461 = vmatprep.subr.mxu0 0.0
        %462 = vmatpush1.xpose.msra.mxu0 0.0
        %463 = vmatprep.subr.mxu0 0.0
        %464 = vmatpush1.xpose.msra.mxu0 0.0
        %465 = vmatprep.subr.mxu0 0.0
        %466 = vmatpush1.xpose.msra.mxu0 0.0
        %467 = vmatprep.subr.mxu0 0.0
        %468 = vmatpush1.xpose.msra.mxu0 0.0
        %469 = vmatprep.subr.mxu0 0.0
        %470 = vmatpush1.xpose.msra.mxu0 0.0
        %471 = vmatprep.subr.mxu0 0.0
        %472 = vmatpush1.xpose.msra.mxu0 0.0
        %473 = vmatprep.subr.mxu0 0.0
        %474 = vmatpush1.xpose.msra.mxu0 0.0
        %475 = vmatprep.mubr.f32.mxu0 0.0
        %476 = vmatmul.mubr.f32.gmra.mrb[0].mxu0 %v361
        %v477 = vpop.f32.mrb[0].mxu0
        %v478 = vadd.f32 0.0, %v477
        %v479 = vpop.f32.mrb[0].mxu0
        %480 = vdwg.mxu0
        %v482 = vsel %vm238, %v172, 0
        %v485 = vsel %vm238, %v206, 0
        %v488 = vsel %vm238, %v207, 0
        %v491 = vsel %vm238, %v208, 0
        %v494 = vsel %vm238, %v209, 0
        %v497 = vsel %vm238, %v210, 0
        %v500 = vsel %vm238, %v211, 0
        %v503 = vsel %vm238, %v212, 0
        %v506 = vsel %vm238, %v213, 0
        %v509 = vsel %vm238, %v214, 0
        %v512 = vsel %vm238, %v215, 0
        %v515 = vsel %vm238, %v216, 0
        %v518 = vsel %vm238, %v217, 0
        %v521 = vsel %vm238, %v218, 0
        %v524 = vsel %vm238, %v219, 0
        %v527 = vsel %vm238, %v220, 0
        %v530 = vsel %vm238, %v221, 0
        %532 = vmatprep.subr.mxu0 0.0
        %533 = vmatpush1.xpose.msra.mxu0 %v485
        %534 = vmatprep.subr.mxu0 0.0
        %535 = vmatpush1.xpose.msra.mxu0 %v488
        %536 = vmatprep.subr.mxu0 0.0
        %537 = vmatpush1.xpose.msra.mxu0 %v491
        %538 = vmatprep.subr.mxu0 0.0
        %539 = vmatpush1.xpose.msra.mxu0 %v494
        %540 = vmatprep.subr.mxu0 0.0
        %541 = vmatpush1.xpose.msra.mxu0 %v497
        %542 = vmatprep.subr.mxu0 0.0
        %543 = vmatpush1.xpose.msra.mxu0 %v500
        %544 = vmatprep.subr.mxu0 0.0
        %545 = vmatpush1.xpose.msra.mxu0 %v503
        %546 = vmatprep.subr.mxu0 0.0
        %547 = vmatpush1.xpose.msra.mxu0 %v506
        %548 = vmatprep.subr.mxu0 0.0
        %549 = vmatpush1.xpose.msra.mxu0 %v509
        %550 = vmatprep.subr.mxu0 0.0
        %551 = vmatpush1.xpose.msra.mxu0 %v512
        %552 = vmatprep.subr.mxu0 0.0
        %553 = vmatpush1.xpose.msra.mxu0 %v515
        %554 = vmatprep.subr.mxu0 0.0
        %555 = vmatpush1.xpose.msra.mxu0 %v518
        %556 = vmatprep.subr.mxu0 0.0
        %557 = vmatpush1.xpose.msra.mxu0 %v521
        %558 = vmatprep.subr.mxu0 0.0
        %559 = vmatpush1.xpose.msra.mxu0 %v524
        %560 = vmatprep.subr.mxu0 0.0
        %561 = vmatpush1.xpose.msra.mxu0 %v527
        %562 = vmatprep.subr.mxu0 0.0
        %563 = vmatpush1.xpose.msra.mxu0 %v530
        %564 = vmatprep.subr.mxu0 0.0
        %565 = vmatpush1.xpose.msra.mxu0 0.0
        %566 = vmatprep.subr.mxu0 0.0
        %567 = vmatpush1.xpose.msra.mxu0 0.0
        %568 = vmatprep.subr.mxu0 0.0
        %569 = vmatpush1.xpose.msra.mxu0 0.0
        %570 = vmatprep.subr.mxu0 0.0
        %571 = vmatpush1.xpose.msra.mxu0 0.0
        %572 = vmatprep.subr.mxu0 0.0
        %573 = vmatpush1.xpose.msra.mxu0 0.0
        %574 = vmatprep.subr.mxu0 0.0
        %575 = vmatpush1.xpose.msra.mxu0 0.0
        %576 = vmatprep.subr.mxu0 0.0
        %577 = vmatpush1.xpose.msra.mxu0 0.0
        %578 = vmatprep.subr.mxu0 0.0
        %579 = vmatpush1.xpose.msra.mxu0 0.0
        %580 = vmatprep.subr.mxu0 0.0
        %581 = vmatpush1.xpose.msra.mxu0 0.0
        %582 = vmatprep.subr.mxu0 0.0
        %583 = vmatpush1.xpose.msra.mxu0 0.0
        %584 = vmatprep.subr.mxu0 0.0
        %585 = vmatpush1.xpose.msra.mxu0 0.0
        %586 = vmatprep.subr.mxu0 0.0
        %587 = vmatpush1.xpose.msra.mxu0 0.0
        %588 = vmatprep.subr.mxu0 0.0
        %589 = vmatpush1.xpose.msra.mxu0 0.0
        %590 = vmatprep.subr.mxu0 0.0
        %591 = vmatpush1.xpose.msra.mxu0 0.0
        %592 = vmatprep.subr.mxu0 0.0
        %593 = vmatpush1.xpose.msra.mxu0 0.0
        %594 = vmatprep.subr.mxu0 0.0
        %595 = vmatpush1.xpose.msra.mxu0 0.0
        %596 = vmatprep.mubr.f32.mxu0 0.0
        %597 = vmatmul.mubr.f32.gmra.mrb[0].mxu0 %v482
        %v598 = vpop.f32.mrb[0].mxu0
        %v599 = vadd.f32 0.0, %v598
        %v600 = vpop.f32.mrb[0].mxu0
        %601 = vdwg.mxu0
        %v603 = vsel %vm238, %v173, 0
        %v606 = vsel %vm238, %v222, 0
        %v609 = vsel %vm238, %v223, 0
        %v612 = vsel %vm238, %v224, 0
        %v615 = vsel %vm238, %v225, 0
        %v618 = vsel %vm238, %v226, 0
        %v621 = vsel %vm238, %v227, 0
        %v624 = vsel %vm238, %v228, 0
        %v627 = vsel %vm238, %v229, 0
        %v630 = vsel %vm238, %v230, 0
        %v633 = vsel %vm238, %v231, 0
        %v636 = vsel %vm238, %v232, 0
        %v639 = vsel %vm238, %v233, 0
        %v642 = vsel %vm238, %v234, 0
        %v645 = vsel %vm238, %v235, 0
        %v648 = vsel %vm238, %v236, 0
        %v651 = vsel %vm238, %v237, 0
        %653 = vmatprep.subr.mxu0 0.0
        %654 = vmatpush1.xpose.msra.mxu0 %v606
        %655 = vmatprep.subr.mxu0 0.0
        %656 = vmatpush1.xpose.msra.mxu0 %v609
        %657 = vmatprep.subr.mxu0 0.0
        %658 = vmatpush1.xpose.msra.mxu0 %v612
        %659 = vmatprep.subr.mxu0 0.0
        %660 = vmatpush1.xpose.msra.mxu0 %v615
        %661 = vmatprep.subr.mxu0 0.0
        %662 = vmatpush1.xpose.msra.mxu0 %v618
        %663 = vmatprep.subr.mxu0 0.0
        %664 = vmatpush1.xpose.msra.mxu0 %v621
        %665 = vmatprep.subr.mxu0 0.0
        %666 = vmatpush1.xpose.msra.mxu0 %v624
        %667 = vmatprep.subr.mxu0 0.0
        %668 = vmatpush1.xpose.msra.mxu0 %v627
        %669 = vmatprep.subr.mxu0 0.0
        %670 = vmatpush1.xpose.msra.mxu0 %v630
        %671 = vmatprep.subr.mxu0 0.0
        %672 = vmatpush1.xpose.msra.mxu0 %v633
        %673 = vmatprep.subr.mxu0 0.0
        %674 = vmatpush1.xpose.msra.mxu0 %v636
        %675 = vmatprep.subr.mxu0 0.0
        %676 = vmatpush1.xpose.msra.mxu0 %v639
        %677 = vmatprep.subr.mxu0 0.0
        %678 = vmatpush1.xpose.msra.mxu0 %v642
        %679 = vmatprep.subr.mxu0 0.0
        %680 = vmatpush1.xpose.msra.mxu0 %v645
        %681 = vmatprep.subr.mxu0 0.0
        %682 = vmatpush1.xpose.msra.mxu0 %v648
        %683 = vmatprep.subr.mxu0 0.0
        %684 = vmatpush1.xpose.msra.mxu0 %v651
        %685 = vmatprep.subr.mxu0 0.0
        %686 = vmatpush1.xpose.msra.mxu0 0.0
        %687 = vmatprep.subr.mxu0 0.0
        %688 = vmatpush1.xpose.msra.mxu0 0.0
        %689 = vmatprep.subr.mxu0 0.0
        %690 = vmatpush1.xpose.msra.mxu0 0.0
        %691 = vmatprep.subr.mxu0 0.0
        %692 = vmatpush1.xpose.msra.mxu0 0.0
        %693 = vmatprep.subr.mxu0 0.0
        %694 = vmatpush1.xpose.msra.mxu0 0.0
        %695 = vmatprep.subr.mxu0 0.0
        %696 = vmatpush1.xpose.msra.mxu0 0.0
        %697 = vmatprep.subr.mxu0 0.0
        %698 = vmatpush1.xpose.msra.mxu0 0.0
        %699 = vmatprep.subr.mxu0 0.0
        %700 = vmatpush1.xpose.msra.mxu0 0.0
        %701 = vmatprep.subr.mxu0 0.0
        %702 = vmatpush1.xpose.msra.mxu0 0.0
        %703 = vmatprep.subr.mxu0 0.0
        %704 = vmatpush1.xpose.msra.mxu0 0.0
        %705 = vmatprep.subr.mxu0 0.0
        %706 = vmatpush1.xpose.msra.mxu0 0.0
        %707 = vmatprep.subr.mxu0 0.0
        %708 = vmatpush1.xpose.msra.mxu0 0.0
        %709 = vmatprep.subr.mxu0 0.0
        %710 = vmatpush1.xpose.msra.mxu0 0.0
        %711 = vmatprep.subr.mxu0 0.0
        %712 = vmatpush1.xpose.msra.mxu0 0.0
        %713 = vmatprep.subr.mxu0 0.0
        %714 = vmatpush1.xpose.msra.mxu0 0.0
        %715 = vmatprep.subr.mxu0 0.0
        %716 = vmatpush1.xpose.msra.mxu0 0.0
        %717 = vmatprep.mubr.f32.mxu0 0.0
        %718 = vmatmul.mubr.f32.gmra.mrb[0].mxu0 %v603
        %v719 = vpop.f32.mrb[0].mxu0
        %v720 = vadd.f32 0.0, %v719
        %v721 = vpop.f32.mrb[0].mxu0
        %722 = vdwg.mxu0
        %723 = vst [vmem:[%s155] sm:$0xff] %v357
        %724 = vst [vmem:[%s155 + $0x8] sm:$0xff] %v478
        %725 = vst [vmem:[%s155 + $0x10] sm:$0xff] %v599
        %726 = vst [vmem:[%s155 + $0x18] sm:$0xff] %v720
        %s727 = sand.u32 %s76, 1
        %s728 = scalar_lea.sflag [#allocation3], %s727
        %s729 = sand.u32 %s76, 1
        %s730 = smul.addr %s729, 32
        %s731 = scalar_lea.vmem [#allocation2], %s730
        // Predicated region
        $region29: #{tpu_custom_call.1} parent=27 // pred_check
          %p732 = pneg %p86
        $region30: #{tpu_custom_call.1} parent=27 // pred_check_branch
          %734 = sbr.rel (%p732) target = $region32
        $region31: #{tpu_custom_call.1} parent=27 // pred_region
          %s735 = smul.u32 4, %s16
          %s737 = ssub.s32 512, 512
          %738 = vsyncadd %s728, %s737
          %s739 = smul.addr %s735, 128
          %s740 = scalar_lea.hbm %s2, %s739
          %s741 = sshll.u32 %s731, 4
          %s742 = int_to_ptr.vmem [resolvable:$true] %s741
          %747 = dma.vmem_to_hbm [thread:$0]  %s742, 512, %s740, %s728, 128, 128, 8
        $region32: #{tpu_custom_call.1} parent=27 // pred_fallthru
          _
      $region28: #{tpu_custom_call.1} parent=5 // pred_fallthru
        _
      %p748 = scmp.le.s32.totalorder 2, %s11
      // Predicated region
      $region33: #{tpu_custom_call.1} parent=5 // pred_check
        %p749 = pneg %p748
      $region34: #{tpu_custom_call.1} parent=5 // pred_check_branch
        %751 = sbr.rel (%p749) target = $region36
      $region35: #{tpu_custom_call.1} parent=5 // pred_region
        %s752 = ssub.s32 %s11, 2
        // Predicated region
        $region37: #{tpu_custom_call.1} parent=35 // pred_check
          %p753 = pneg %p92
        $region38: #{tpu_custom_call.1} parent=35 // pred_check_branch
          %755 = sbr.rel (%p753) target = $region40
        $region39: #{tpu_custom_call.1} parent=35 // pred_region
          %s756 = sand.u32 %s77, 1
          %s757 = scalar_lea.sflag [#allocation3], %s756
          %s758 = sand.u32 %s77, 1
          %s759 = smul.addr %s758, 32
          %s760 = scalar_lea.vmem [#allocation2], %s759
          %761 = dma.done %s757, 512
        $region40: #{tpu_custom_call.1} parent=35 // pred_fallthru
          _
      $region36: #{tpu_custom_call.1} parent=5 // pred_fallthru
        _
    $region6: #{tpu_custom_call.1} parent=1 // loop_footer
      %s15 = sadd.s32 1, %s11
    $region7: #{tpu_custom_call.1} parent=1 // loop_footer_branch
      %10 = sbr.rel target = $region3
    $region8: #{tpu_custom_call.1} parent=1 // loop_exit
      _
    %762 = vsyncpa [#allocation3], 1
    %s763 = scalar_lea.sflag [#allocation3], 1
    %764 = vsyncpa %s763, 1

</llo_original>
